<compile_context>
chip_gen: v7x
topology: tpu7x:2x2x1
jax: 0.10.0
libtpu: 0.0.40
codegen_flags: <defaults>
</compile_context>

<pallas_src>
import functools
import math

import jax
import jax.numpy as jnp
from jax.experimental import pallas as pl
from jax.experimental.pallas import tpu as pltpu


def san_kernel(x_ref, wqkv_ref, bqkv_ref, wo_ref, bo_ref, g_ref, beta_ref,
               o_ref, *, d_model, nhead, bt):
    S = x_ref.shape[1]
    hd = d_model // nhead

    x = x_ref[...]                                    # (bt, S, D) f32
    x2d = x.reshape(bt * S, d_model)                  # leading-dim merge (layout-compatible)

    # ---- QKV projection: one MXU matmul, bf16 operands, f32 accumulation ----
    # (Q columns of wqkv/bqkv are pre-scaled by 1/sqrt(head_dim) in the
    #  wrapper, so no per-head scaling is needed below.)
    qkv = jnp.dot(x2d.astype(jnp.bfloat16), wqkv_ref[...],
                  preferred_element_type=jnp.float32)                 # (bt*S, 3D)
    qkv = qkv + bqkv_ref[...]
    qkv = qkv.reshape(bt, S, 3 * d_model)             # leading-dim split (cheap)

    # ---- per-head attention, batched over the batch tile ----
    heads = []
    for h in range(nhead):
        o0 = h * hd
        qh = qkv[:, :, o0:o0 + hd].astype(jnp.bfloat16)                         # (bt, S, hd)
        kh = qkv[:, :, d_model + o0:d_model + o0 + hd].astype(jnp.bfloat16)
        vh = qkv[:, :, 2 * d_model + o0:2 * d_model + o0 + hd].astype(jnp.bfloat16)

        s = jnp.einsum('bqd,bkd->bqk', qh, kh,
                       preferred_element_type=jnp.float32)                      # (bt, S, S)
        s = s - jnp.max(s, axis=-1, keepdims=True)
        p = jnp.exp(s)
        # approx reciprocal uses the EUP slot; ~1e-3 rel. error, covered by
        # the bf16 tolerance (set approx=False for exact softmax parity).
        p = p * pl.reciprocal(jnp.sum(p, axis=-1, keepdims=True), approx=True)

        heads.append(jnp.einsum('bqk,bkd->bqd', p.astype(jnp.bfloat16), vh,
                                preferred_element_type=jnp.float32))            # (bt, S, hd)

    # heads -> (bt*S, D); output projection as ONE K=D matmul (no per-head Wo).
    attn = jnp.concatenate(heads, axis=-1).reshape(bt * S, d_model)
    proj = jnp.dot(attn.astype(jnp.bfloat16), wo_ref[...],
                   preferred_element_type=jnp.float32) + bo_ref[...]            # (bt*S, D)

    # ---- residual (dropout = identity in eval) + LayerNorm over all rows ----
    y = x2d + proj
    mu = jnp.mean(y, axis=-1, keepdims=True)
    var = jnp.mean(jnp.square(y - mu), axis=-1, keepdims=True)
    normed = (y - mu) * jax.lax.rsqrt(var + 1e-5)
    out = normed * g_ref[...] + beta_ref[...]

    # Single dense store for the whole (bt, S, D) slab.
    o_ref[...] = out.reshape(bt, S, d_model).astype(o_ref.dtype)


def prepare_params(params, *, nhead):
    """One-time param prep: fold 1/sqrt(head_dim) into the Q columns of the
    QKV weights/bias and cast matmul weights to bf16 (MXU-native).  Biases and
    LayerNorm params stay f32."""
    D = params["wo_t"].shape[0]
    hd = D // nhead
    scale = 1.0 / math.sqrt(hd)
    col_scale = jnp.concatenate(
        [jnp.full((D,), scale, jnp.float32), jnp.ones((2 * D,), jnp.float32)])
    return {
        "wqkv_t": (params["wqkv_t"] * col_scale).astype(jnp.bfloat16),
        "bqkv": (params["bqkv"] * col_scale).astype(jnp.float32),
        "wo_t": params["wo_t"].astype(jnp.bfloat16),
        "bo": params["bo"].astype(jnp.float32),
        "gamma": params["gamma"].astype(jnp.float32),
        "beta": params["beta"].astype(jnp.float32),
    }


def _pick_batch_tile(B, S, D, nhead):
    """VMEM-aware tile: biggest divisor of B that fits a conservative budget
    (sized for v7x's 64 MiB VMEM with double-buffering headroom) while keeping
    >= 2 grid steps when B >= 2 so v7x's two TensorCores both get work."""
    bytes_per_row = 4 * (4 * S * D        # in/out slabs (double-buffered) + temporaries
                         + 3 * S * D      # qkv slab
                         + 2 * S * S)     # scores + probs (per head, live once)
    budget = 8 * 1024 * 1024
    best = 1
    for cand in range(1, B + 1):
        if B % cand:
            continue
        if cand * bytes_per_row > budget:
            continue
        if B >= 2 and B // cand < 2:
            continue
        best = cand
    return best


def san_forward(src, prep, *, nhead, batch_tile=None):
    """src: (S, B, D) float32, PyTorch MultiheadAttention convention."""
    S, B, D = src.shape
    hd = D // nhead
    if batch_tile is None:
        batch_tile = _pick_batch_tile(B, S, D, nhead)
    assert B % batch_tile == 0

    # One cheap wrapper transpose so the kernel blocks are sublane/lane dense.
    x_bsd = jnp.transpose(src, (1, 0, 2))             # (B, S, D)

    kernel = functools.partial(san_kernel, d_model=D, nhead=nhead,
                               bt=batch_tile)

    flops = (2 * B * S * D * 3 * D                    # QKV projection
             + 2 * B * nhead * S * S * hd * 2         # scores + AV
             + 2 * B * S * D * D                      # output projection
             + 12 * B * S * D)                        # residual + LayerNorm
    cost = pl.CostEstimate(
        flops=flops,
        transcendentals=B * nhead * S * S + B * S,
        bytes_accessed=4 * 2 * B * S * D + 2 * (3 * D * D + D * D) + 4 * 8 * D)

    out = pl.pallas_call(
        kernel,
        out_shape=jax.ShapeDtypeStruct((B, S, D), src.dtype),
        grid=(B // batch_tile,),
        in_specs=[
            pl.BlockSpec((batch_tile, S, D), lambda i: (i, 0, 0)),   # src slab
            pl.BlockSpec((D, 3 * D), lambda i: (0, 0)),              # Wqkv^T (bf16, resident)
            pl.BlockSpec((1, 3 * D), lambda i: (0, 0)),              # bqkv
            pl.BlockSpec((D, D), lambda i: (0, 0)),                  # Wo^T (bf16, resident)
            pl.BlockSpec((1, D), lambda i: (0, 0)),                  # bo
            pl.BlockSpec((1, D), lambda i: (0, 0)),                  # gamma
            pl.BlockSpec((1, D), lambda i: (0, 0)),                  # beta
        ],
        out_specs=pl.BlockSpec((batch_tile, S, D), lambda i: (i, 0, 0)),
        compiler_params=pltpu.CompilerParams(
            dimension_semantics=("parallel",),
            vmem_limit_bytes=48 * 1024 * 1024),
        cost_estimate=cost,
    )(x_bsd, prep["wqkv_t"], prep["bqkv"], prep["wo_t"], prep["bo"],
      prep["gamma"], prep["beta"])

    return jnp.transpose(out, (1, 0, 2))              # back to (S, B, D)


def san_reference(src, params, *, nhead):
    """Pure-JAX f32 reference mirroring torch.nn.MultiheadAttention (eval) + LN."""
    S, B, D = src.shape
    hd = D // nhead
    x = jnp.transpose(src, (1, 0, 2))                  # (B, S, D)
    qkv = x @ params["wqkv_t"] + params["bqkv"][0]     # (B, S, 3D)
    q, k, v = qkv[..., :D], qkv[..., D:2 * D], qkv[..., 2 * D:]

    def split(t):  # (B, S, D) -> (B, nh, S, hd)
        return t.reshape(B, S, nhead, hd).transpose(0, 2, 1, 3)

    qh, kh, vh = split(q), split(k), split(v)
    s = jnp.einsum("bhqd,bhkd->bhqk", qh, kh) / math.sqrt(hd)
    p = jax.nn.softmax(s, axis=-1)
    o = jnp.einsum("bhqk,bhkd->bhqd", p, vh).transpose(0, 2, 1, 3).reshape(B, S, D)
    proj = o @ params["wo_t"] + params["bo"][0]
    y = x + proj
    mu = jnp.mean(y, -1, keepdims=True)
    var = jnp.mean((y - mu) ** 2, -1, keepdims=True)
    out = (y - mu) / jnp.sqrt(var + 1e-5) * params["gamma"][0] + params["beta"][0]
    return jnp.transpose(out, (1, 0, 2))


if __name__ == "__main__":
    d_model, nhead = 32, 4
    S, B = 8, 2

    key = jax.random.PRNGKey(0)
    k_src, k_wqkv, k_bqkv, k_wo, k_bo = jax.random.split(key, 5)

    src = jax.random.normal(k_src, (S, B, d_model), dtype=jnp.float32)

    params = {
        # stored pre-transposed: y = x @ W.T  ->  x @ wqkv_t
        "wqkv_t": jax.random.normal(k_wqkv, (d_model, 3 * d_model),
                                    dtype=jnp.float32) * 0.1,
        "bqkv": jax.random.normal(k_bqkv, (1, 3 * d_model),
                                  dtype=jnp.float32) * 0.1,
        "wo_t": jax.random.normal(k_wo, (d_model, d_model),
                                  dtype=jnp.float32) * 0.1,
        "bo": jax.random.normal(k_bo, (1, d_model), dtype=jnp.float32) * 0.1,
        "gamma": jnp.ones((1, d_model), dtype=jnp.float32),
        "beta": jnp.zeros((1, d_model), dtype=jnp.float32),
    }

    prep = prepare_params(params, nhead=nhead)

    out = san_forward(src, prep, nhead=nhead)
    out = jax.block_until_ready(out)

    ref = san_reference(src, params, nhead=nhead)
    assert out.shape == (S, B, d_model)
    max_err = float(jnp.max(jnp.abs(out - ref)))
    # bf16 matmul operands + approx reciprocal -> loosened tolerance vs f32 ref.
    assert jnp.allclose(out, ref, atol=5e-2, rtol=5e-2), max_err

    print("KERNEL_OK")
</pallas_src>

<mosaic_0001>
module attributes {stable_mosaic.version = 11 : i64} {
  func.func @san_kernel(%arg0: i32, %arg1: memref<1x8x32xf32, #tpu.memory_space<vmem>>, %arg2: memref<32x96xbf16, #tpu.memory_space<vmem>>, %arg3: memref<1x96xf32, #tpu.memory_space<vmem>>, %arg4: memref<32x32xbf16, #tpu.memory_space<vmem>>, %arg5: memref<1x32xf32, #tpu.memory_space<vmem>>, %arg6: memref<1x32xf32, #tpu.memory_space<vmem>>, %arg7: memref<1x32xf32, #tpu.memory_space<vmem>>, %arg8: memref<1x8x32xf32, #tpu.memory_space<vmem>>) attributes {dimension_semantics = [#tpu.dimension_semantics<parallel>], iteration_bounds = array<i64: 2>, scalar_prefetch = 0 : i64, scratch_operands = 0 : i64, tpu.core_type = #tpu.core_type<tc>, window_params = [{transform_indices = @transform_0, window_bounds = array<i64: 1, 8, 32>}, {pipeline_mode = #tpu.pipeline_mode<synchronous>, transform_indices = @transform_1, window_bounds = array<i64: 32, 96>}, {pipeline_mode = #tpu.pipeline_mode<synchronous>, transform_indices = @transform_2, window_bounds = array<i64: 1, 96>}, {pipeline_mode = #tpu.pipeline_mode<synchronous>, transform_indices = @transform_3, window_bounds = array<i64: 32, 32>}, {pipeline_mode = #tpu.pipeline_mode<synchronous>, transform_indices = @transform_4, window_bounds = array<i64: 1, 32>}, {pipeline_mode = #tpu.pipeline_mode<synchronous>, transform_indices = @transform_5, window_bounds = array<i64: 1, 32>}, {pipeline_mode = #tpu.pipeline_mode<synchronous>, transform_indices = @transform_6, window_bounds = array<i64: 1, 32>}, {transform_indices = @transform_7, window_bounds = array<i64: 1, 8, 32>}]} {
    %c0 = arith.constant 0 : index
    %c0_0 = arith.constant 0 : index
    %c0_1 = arith.constant 0 : index
    %0 = vector.load %arg1[%c0, %c0_0, %c0_1] : memref<1x8x32xf32, #tpu.memory_space<vmem>>, vector<1x8x32xf32>
    %1 = vector.shape_cast %0 : vector<1x8x32xf32> to vector<8x32xf32>
    %2 = arith.truncf %1 : vector<8x32xf32> to vector<8x32xbf16>
    %c0_2 = arith.constant 0 : index
    %c0_3 = arith.constant 0 : index
    %3 = vector.load %arg2[%c0_2, %c0_3] : memref<32x96xbf16, #tpu.memory_space<vmem>>, vector<32x96xbf16>
    %cst = arith.constant dense<0.000000e+00> : vector<8x96xf32>
    %4 = tpu.matmul %2, %3, %cst {dimension_numbers = #tpu.dot_dimension_numbers<[1], [0], [0], [1], [0, 0, 1, 1], [], []>} : vector<8x32xbf16>, vector<32x96xbf16>, vector<8x96xf32> -> vector<8x96xf32>
    %c0_4 = arith.constant 0 : index
    %c0_5 = arith.constant 0 : index
    %5 = vector.load %arg3[%c0_4, %c0_5] : memref<1x96xf32, #tpu.memory_space<vmem>>, vector<1x96xf32>
    %6 = vector.broadcast %5 : vector<1x96xf32> to vector<8x96xf32>
    %7 = arith.addf %4, %6 : vector<8x96xf32>
    %8 = vector.shape_cast %7 : vector<8x96xf32> to vector<1x8x96xf32>
    %9 = vector.extract_strided_slice %8 {offsets = [0, 0, 0], sizes = [1, 8, 8], strides = [1, 1, 1]} : vector<1x8x96xf32> to vector<1x8x8xf32>
    %10 = arith.truncf %9 : vector<1x8x8xf32> to vector<1x8x8xbf16>
    %11 = vector.extract_strided_slice %8 {offsets = [0, 0, 32], sizes = [1, 8, 8], strides = [1, 1, 1]} : vector<1x8x96xf32> to vector<1x8x8xf32>
    %12 = arith.truncf %11 : vector<1x8x8xf32> to vector<1x8x8xbf16>
    %13 = vector.extract_strided_slice %8 {offsets = [0, 0, 64], sizes = [1, 8, 8], strides = [1, 1, 1]} : vector<1x8x96xf32> to vector<1x8x8xf32>
    %14 = arith.truncf %13 : vector<1x8x8xf32> to vector<1x8x8xbf16>
    "tpu.trace_start"() <{level = 10 : i32, message = "bqd,bkd->bqk"}> : () -> ()
    %cst_6 = arith.constant dense<0.000000e+00> : vector<1x8x8xf32>
    %15 = tpu.matmul %10, %12, %cst_6 {dimension_numbers = #tpu.dot_dimension_numbers<[2], [2], [1], [1], [0, 0, 0, 1, 1, 1], [0], [0]>} : vector<1x8x8xbf16>, vector<1x8x8xbf16>, vector<1x8x8xf32> -> vector<1x8x8xf32>
    "tpu.trace_stop"() : () -> ()
    %cst_7 = arith.constant dense<0xFF800000> : vector<1x8xf32>
    %16 = vector.multi_reduction <maximumf>, %15, %cst_7 [2] : vector<1x8x8xf32> to vector<1x8xf32>
    %17 = vector.shape_cast %16 : vector<1x8xf32> to vector<1x8x1xf32>
    %18 = vector.broadcast %17 : vector<1x8x1xf32> to vector<1x8x8xf32>
    %19 = arith.subf %15, %18 : vector<1x8x8xf32>
    %20 = math.exp %19 : vector<1x8x8xf32>
    %cst_8 = arith.constant dense<0.000000e+00> : vector<1x8xf32>
    %21 = vector.multi_reduction <add>, %20, %cst_8 [2] : vector<1x8x8xf32> to vector<1x8xf32>
    %22 = vector.shape_cast %21 : vector<1x8xf32> to vector<1x8x1xf32>
    %23 = tpu.reciprocal %22 {approx = true} : vector<1x8x1xf32> -> vector<1x8x1xf32>
    %24 = vector.broadcast %23 : vector<1x8x1xf32> to vector<1x8x8xf32>
    %25 = arith.mulf %20, %24 : vector<1x8x8xf32>
    %26 = arith.truncf %25 : vector<1x8x8xf32> to vector<1x8x8xbf16>
    "tpu.trace_start"() <{level = 10 : i32, message = "bqk,bkd->bqd"}> : () -> ()
    %cst_9 = arith.constant dense<0.000000e+00> : vector<1x8x8xf32>
    %27 = tpu.matmul %26, %14, %cst_9 {dimension_numbers = #tpu.dot_dimension_numbers<[2], [1], [1], [2], [0, 0, 0, 1, 1, 2], [0], [0]>} : vector<1x8x8xbf16>, vector<1x8x8xbf16>, vector<1x8x8xf32> -> vector<1x8x8xf32>
    "tpu.trace_stop"() : () -> ()
    %28 = vector.extract_strided_slice %8 {offsets = [0, 0, 8], sizes = [1, 8, 8], strides = [1, 1, 1]} : vector<1x8x96xf32> to vector<1x8x8xf32>
    %29 = arith.truncf %28 : vector<1x8x8xf32> to vector<1x8x8xbf16>
    %30 = vector.extract_strided_slice %8 {offsets = [0, 0, 40], sizes = [1, 8, 8], strides = [1, 1, 1]} : vector<1x8x96xf32> to vector<1x8x8xf32>
    %31 = arith.truncf %30 : vector<1x8x8xf32> to vector<1x8x8xbf16>
    %32 = vector.extract_strided_slice %8 {offsets = [0, 0, 72], sizes = [1, 8, 8], strides = [1, 1, 1]} : vector<1x8x96xf32> to vector<1x8x8xf32>
    %33 = arith.truncf %32 : vector<1x8x8xf32> to vector<1x8x8xbf16>
    "tpu.trace_start"() <{level = 10 : i32, message = "bqd,bkd->bqk"}> : () -> ()
    %cst_10 = arith.constant dense<0.000000e+00> : vector<1x8x8xf32>
    %34 = tpu.matmul %29, %31, %cst_10 {dimension_numbers = #tpu.dot_dimension_numbers<[2], [2], [1], [1], [0, 0, 0, 1, 1, 1], [0], [0]>} : vector<1x8x8xbf16>, vector<1x8x8xbf16>, vector<1x8x8xf32> -> vector<1x8x8xf32>
    "tpu.trace_stop"() : () -> ()
    %cst_11 = arith.constant dense<0xFF800000> : vector<1x8xf32>
    %35 = vector.multi_reduction <maximumf>, %34, %cst_11 [2] : vector<1x8x8xf32> to vector<1x8xf32>
    %36 = vector.shape_cast %35 : vector<1x8xf32> to vector<1x8x1xf32>
    %37 = vector.broadcast %36 : vector<1x8x1xf32> to vector<1x8x8xf32>
    %38 = arith.subf %34, %37 : vector<1x8x8xf32>
    %39 = math.exp %38 : vector<1x8x8xf32>
    %cst_12 = arith.constant dense<0.000000e+00> : vector<1x8xf32>
    %40 = vector.multi_reduction <add>, %39, %cst_12 [2] : vector<1x8x8xf32> to vector<1x8xf32>
    %41 = vector.shape_cast %40 : vector<1x8xf32> to vector<1x8x1xf32>
    %42 = tpu.reciprocal %41 {approx = true} : vector<1x8x1xf32> -> vector<1x8x1xf32>
    %43 = vector.broadcast %42 : vector<1x8x1xf32> to vector<1x8x8xf32>
    %44 = arith.mulf %39, %43 : vector<1x8x8xf32>
    %45 = arith.truncf %44 : vector<1x8x8xf32> to vector<1x8x8xbf16>
    "tpu.trace_start"() <{level = 10 : i32, message = "bqk,bkd->bqd"}> : () -> ()
    %cst_13 = arith.constant dense<0.000000e+00> : vector<1x8x8xf32>
    %46 = tpu.matmul %45, %33, %cst_13 {dimension_numbers = #tpu.dot_dimension_numbers<[2], [1], [1], [2], [0, 0, 0, 1, 1, 2], [0], [0]>} : vector<1x8x8xbf16>, vector<1x8x8xbf16>, vector<1x8x8xf32> -> vector<1x8x8xf32>
    "tpu.trace_stop"() : () -> ()
    %47 = vector.extract_strided_slice %8 {offsets = [0, 0, 16], sizes = [1, 8, 8], strides = [1, 1, 1]} : vector<1x8x96xf32> to vector<1x8x8xf32>
    %48 = arith.truncf %47 : vector<1x8x8xf32> to vector<1x8x8xbf16>
    %49 = vector.extract_strided_slice %8 {offsets = [0, 0, 48], sizes = [1, 8, 8], strides = [1, 1, 1]} : vector<1x8x96xf32> to vector<1x8x8xf32>
    %50 = arith.truncf %49 : vector<1x8x8xf32> to vector<1x8x8xbf16>
    %51 = vector.extract_strided_slice %8 {offsets = [0, 0, 80], sizes = [1, 8, 8], strides = [1, 1, 1]} : vector<1x8x96xf32> to vector<1x8x8xf32>
    %52 = arith.truncf %51 : vector<1x8x8xf32> to vector<1x8x8xbf16>
    "tpu.trace_start"() <{level = 10 : i32, message = "bqd,bkd->bqk"}> : () -> ()
    %cst_14 = arith.constant dense<0.000000e+00> : vector<1x8x8xf32>
    %53 = tpu.matmul %48, %50, %cst_14 {dimension_numbers = #tpu.dot_dimension_numbers<[2], [2], [1], [1], [0, 0, 0, 1, 1, 1], [0], [0]>} : vector<1x8x8xbf16>, vector<1x8x8xbf16>, vector<1x8x8xf32> -> vector<1x8x8xf32>
    "tpu.trace_stop"() : () -> ()
    %cst_15 = arith.constant dense<0xFF800000> : vector<1x8xf32>
    %54 = vector.multi_reduction <maximumf>, %53, %cst_15 [2] : vector<1x8x8xf32> to vector<1x8xf32>
    %55 = vector.shape_cast %54 : vector<1x8xf32> to vector<1x8x1xf32>
    %56 = vector.broadcast %55 : vector<1x8x1xf32> to vector<1x8x8xf32>
    %57 = arith.subf %53, %56 : vector<1x8x8xf32>
    %58 = math.exp %57 : vector<1x8x8xf32>
    %cst_16 = arith.constant dense<0.000000e+00> : vector<1x8xf32>
    %59 = vector.multi_reduction <add>, %58, %cst_16 [2] : vector<1x8x8xf32> to vector<1x8xf32>
    %60 = vector.shape_cast %59 : vector<1x8xf32> to vector<1x8x1xf32>
    %61 = tpu.reciprocal %60 {approx = true} : vector<1x8x1xf32> -> vector<1x8x1xf32>
    %62 = vector.broadcast %61 : vector<1x8x1xf32> to vector<1x8x8xf32>
    %63 = arith.mulf %58, %62 : vector<1x8x8xf32>
    %64 = arith.truncf %63 : vector<1x8x8xf32> to vector<1x8x8xbf16>
    "tpu.trace_start"() <{level = 10 : i32, message = "bqk,bkd->bqd"}> : () -> ()
    %cst_17 = arith.constant dense<0.000000e+00> : vector<1x8x8xf32>
    %65 = tpu.matmul %64, %52, %cst_17 {dimension_numbers = #tpu.dot_dimension_numbers<[2], [1], [1], [2], [0, 0, 0, 1, 1, 2], [0], [0]>} : vector<1x8x8xbf16>, vector<1x8x8xbf16>, vector<1x8x8xf32> -> vector<1x8x8xf32>
    "tpu.trace_stop"() : () -> ()
    %66 = vector.extract_strided_slice %8 {offsets = [0, 0, 24], sizes = [1, 8, 8], strides = [1, 1, 1]} : vector<1x8x96xf32> to vector<1x8x8xf32>
    %67 = arith.truncf %66 : vector<1x8x8xf32> to vector<1x8x8xbf16>
    %68 = vector.extract_strided_slice %8 {offsets = [0, 0, 56], sizes = [1, 8, 8], strides = [1, 1, 1]} : vector<1x8x96xf32> to vector<1x8x8xf32>
    %69 = arith.truncf %68 : vector<1x8x8xf32> to vector<1x8x8xbf16>
    %70 = vector.extract_strided_slice %8 {offsets = [0, 0, 88], sizes = [1, 8, 8], strides = [1, 1, 1]} : vector<1x8x96xf32> to vector<1x8x8xf32>
    %71 = arith.truncf %70 : vector<1x8x8xf32> to vector<1x8x8xbf16>
    "tpu.trace_start"() <{level = 10 : i32, message = "bqd,bkd->bqk"}> : () -> ()
    %cst_18 = arith.constant dense<0.000000e+00> : vector<1x8x8xf32>
    %72 = tpu.matmul %67, %69, %cst_18 {dimension_numbers = #tpu.dot_dimension_numbers<[2], [2], [1], [1], [0, 0, 0, 1, 1, 1], [0], [0]>} : vector<1x8x8xbf16>, vector<1x8x8xbf16>, vector<1x8x8xf32> -> vector<1x8x8xf32>
    "tpu.trace_stop"() : () -> ()
    %cst_19 = arith.constant dense<0xFF800000> : vector<1x8xf32>
    %73 = vector.multi_reduction <maximumf>, %72, %cst_19 [2] : vector<1x8x8xf32> to vector<1x8xf32>
    %74 = vector.shape_cast %73 : vector<1x8xf32> to vector<1x8x1xf32>
    %75 = vector.broadcast %74 : vector<1x8x1xf32> to vector<1x8x8xf32>
    %76 = arith.subf %72, %75 : vector<1x8x8xf32>
    %77 = math.exp %76 : vector<1x8x8xf32>
    %cst_20 = arith.constant dense<0.000000e+00> : vector<1x8xf32>
    %78 = vector.multi_reduction <add>, %77, %cst_20 [2] : vector<1x8x8xf32> to vector<1x8xf32>
    %79 = vector.shape_cast %78 : vector<1x8xf32> to vector<1x8x1xf32>
    %80 = tpu.reciprocal %79 {approx = true} : vector<1x8x1xf32> -> vector<1x8x1xf32>
    %81 = vector.broadcast %80 : vector<1x8x1xf32> to vector<1x8x8xf32>
    %82 = arith.mulf %77, %81 : vector<1x8x8xf32>
    %83 = arith.truncf %82 : vector<1x8x8xf32> to vector<1x8x8xbf16>
    "tpu.trace_start"() <{level = 10 : i32, message = "bqk,bkd->bqd"}> : () -> ()
    %cst_21 = arith.constant dense<0.000000e+00> : vector<1x8x8xf32>
    %84 = tpu.matmul %83, %71, %cst_21 {dimension_numbers = #tpu.dot_dimension_numbers<[2], [1], [1], [2], [0, 0, 0, 1, 1, 2], [0], [0]>} : vector<1x8x8xbf16>, vector<1x8x8xbf16>, vector<1x8x8xf32> -> vector<1x8x8xf32>
    "tpu.trace_stop"() : () -> ()
    %85 = tpu.concatenate %27, %46, %65, %84 in 2 : vector<1x8x8xf32>, vector<1x8x8xf32>, vector<1x8x8xf32>, vector<1x8x8xf32> -> vector<1x8x32xf32>
    %86 = vector.shape_cast %85 : vector<1x8x32xf32> to vector<8x32xf32>
    %87 = arith.truncf %86 : vector<8x32xf32> to vector<8x32xbf16>
    %c0_22 = arith.constant 0 : index
    %c0_23 = arith.constant 0 : index
    %88 = vector.load %arg4[%c0_22, %c0_23] : memref<32x32xbf16, #tpu.memory_space<vmem>>, vector<32x32xbf16>
    %cst_24 = arith.constant dense<0.000000e+00> : vector<8x32xf32>
    %89 = tpu.matmul %87, %88, %cst_24 {dimension_numbers = #tpu.dot_dimension_numbers<[1], [0], [0], [1], [0, 0, 1, 1], [], []>} : vector<8x32xbf16>, vector<32x32xbf16>, vector<8x32xf32> -> vector<8x32xf32>
    %c0_25 = arith.constant 0 : index
    %c0_26 = arith.constant 0 : index
    %90 = vector.load %arg5[%c0_25, %c0_26] : memref<1x32xf32, #tpu.memory_space<vmem>>, vector<1x32xf32>
    %91 = vector.broadcast %90 : vector<1x32xf32> to vector<8x32xf32>
    %92 = arith.addf %89, %91 : vector<8x32xf32>
    %93 = arith.addf %1, %92 : vector<8x32xf32>
    %cst_27 = arith.constant dense<0.000000e+00> : vector<8xf32>
    %94 = vector.multi_reduction <add>, %93, %cst_27 [1] : vector<8x32xf32> to vector<8xf32>
    %95 = vector.shape_cast %94 : vector<8xf32> to vector<8x1xf32>
    %cst_28 = arith.constant 3.200000e+01 : f32
    %96 = vector.broadcast %cst_28 : f32 to vector<8x1xf32>
    %97 = arith.divf %95, %96 : vector<8x1xf32>
    %98 = vector.broadcast %97 : vector<8x1xf32> to vector<8x32xf32>
    %99 = arith.subf %93, %98 : vector<8x32xf32>
    %100 = arith.mulf %99, %99 : vector<8x32xf32>
    %cst_29 = arith.constant dense<0.000000e+00> : vector<8xf32>
    %101 = vector.multi_reduction <add>, %100, %cst_29 [1] : vector<8x32xf32> to vector<8xf32>
    %102 = vector.shape_cast %101 : vector<8xf32> to vector<8x1xf32>
    %cst_30 = arith.constant 3.200000e+01 : f32
    %103 = vector.broadcast %cst_30 : f32 to vector<8x1xf32>
    %104 = arith.divf %102, %103 : vector<8x1xf32>
    %105 = vector.broadcast %97 : vector<8x1xf32> to vector<8x32xf32>
    %106 = arith.subf %93, %105 : vector<8x32xf32>
    %cst_31 = arith.constant 9.99999974E-6 : f32
    %107 = vector.broadcast %cst_31 : f32 to vector<8x1xf32>
    %108 = arith.addf %104, %107 : vector<8x1xf32>
    %109 = math.rsqrt %108 : vector<8x1xf32>
    %110 = vector.broadcast %109 : vector<8x1xf32> to vector<8x32xf32>
    %111 = arith.mulf %106, %110 : vector<8x32xf32>
    %c0_32 = arith.constant 0 : index
    %c0_33 = arith.constant 0 : index
    %112 = vector.load %arg6[%c0_32, %c0_33] : memref<1x32xf32, #tpu.memory_space<vmem>>, vector<1x32xf32>
    %113 = vector.broadcast %112 : vector<1x32xf32> to vector<8x32xf32>
    %114 = arith.mulf %111, %113 : vector<8x32xf32>
    %c0_34 = arith.constant 0 : index
    %c0_35 = arith.constant 0 : index
    %115 = vector.load %arg7[%c0_34, %c0_35] : memref<1x32xf32, #tpu.memory_space<vmem>>, vector<1x32xf32>
    %116 = vector.broadcast %115 : vector<1x32xf32> to vector<8x32xf32>
    %117 = arith.addf %114, %116 : vector<8x32xf32>
    %118 = vector.shape_cast %117 : vector<8x32xf32> to vector<1x8x32xf32>
    %c0_36 = arith.constant 0 : index
    %c0_37 = arith.constant 0 : index
    %c0_38 = arith.constant 0 : index
    %119 = vector.load %arg8[%c0_36, %c0_37, %c0_38] : memref<1x8x32xf32, #tpu.memory_space<vmem>>, vector<1x8x32xf32>
    tpu.vector_store %arg8[%c0_36, %c0_37, %c0_38], %118 {strides = array<i32>} : memref<1x8x32xf32, #tpu.memory_space<vmem>>, vector<1x8x32xf32>,
    return
  }
  func.func @transform_0(%arg0: i32) -> (i32, i32, i32) {
    %c0_i32 = arith.constant 0 : i32
    %c0_i32_0 = arith.constant 0 : i32
    %c0_i32_1 = arith.constant 0 : i32
    return %arg0, %c0_i32, %c0_i32_0 : i32, i32, i32
  }
  func.func @transform_1(%arg0: i32) -> (i32, i32) {
    %c0_i32 = arith.constant 0 : i32
    %c0_i32_0 = arith.constant 0 : i32
    %c0_i32_1 = arith.constant 0 : i32
    return %c0_i32, %c0_i32_0 : i32, i32
  }
  func.func @transform_2(%arg0: i32) -> (i32, i32) {
    %c0_i32 = arith.constant 0 : i32
    %c0_i32_0 = arith.constant 0 : i32
    %c0_i32_1 = arith.constant 0 : i32
    return %c0_i32, %c0_i32_0 : i32, i32
  }
  func.func @transform_3(%arg0: i32) -> (i32, i32) {
    %c0_i32 = arith.constant 0 : i32
    %c0_i32_0 = arith.constant 0 : i32
    %c0_i32_1 = arith.constant 0 : i32
    return %c0_i32, %c0_i32_0 : i32, i32
  }
  func.func @transform_4(%arg0: i32) -> (i32, i32) {
    %c0_i32 = arith.constant 0 : i32
    %c0_i32_0 = arith.constant 0 : i32
    %c0_i32_1 = arith.constant 0 : i32
    return %c0_i32, %c0_i32_0 : i32, i32
  }
  func.func @transform_5(%arg0: i32) -> (i32, i32) {
    %c0_i32 = arith.constant 0 : i32
    %c0_i32_0 = arith.constant 0 : i32
    %c0_i32_1 = arith.constant 0 : i32
    return %c0_i32, %c0_i32_0 : i32, i32
  }
  func.func @transform_6(%arg0: i32) -> (i32, i32) {
    %c0_i32 = arith.constant 0 : i32
    %c0_i32_0 = arith.constant 0 : i32
    %c0_i32_1 = arith.constant 0 : i32
    return %c0_i32, %c0_i32_0 : i32, i32
  }
  func.func @transform_7(%arg0: i32) -> (i32, i32, i32) {
    %c0_i32 = arith.constant 0 : i32
    %c0_i32_0 = arith.constant 0 : i32
    %c0_i32_1 = arith.constant 0 : i32
    return %arg0, %c0_i32, %c0_i32_0 : i32, i32, i32
  }
}

</mosaic_0001>

<llo_original>
// kernel: tpu_custom_call.1
$region0: #{tpu_custom_call.1}
  #allocation0 [shape = 'u32[]', space=smem, size = 0x4, offset = 0x4, fixed_abs, tag = 'smem constant byte address 0x4 - core index']
  #allocation1 [shape = 'u32[144,128]{1,0:T(1,128)}', space=vmem, size = 0x12000, scoped, tag = 'internal scratch']
  %s0 = inlined_call_operand.hbm [shape: f32[2,8,32], index: 0, kind: input, shape index: {}]
  %s1 = inlined_call_operand.hbm [shape: bf16[32,96], index: 1, kind: input, shape index: {}]
  %s2 = inlined_call_operand.vmem [shape: f32[1,96], index: 2, kind: input, shape index: {}]
  %s3 = inlined_call_operand.hbm [shape: bf16[32,32], index: 3, kind: input, shape index: {}]
  %s4 = inlined_call_operand.vmem [shape: f32[1,32], index: 4, kind: input, shape index: {}]
  %s5 = inlined_call_operand.vmem [shape: f32[1,32], index: 5, kind: input, shape index: {}]
  %s6 = inlined_call_operand.vmem [shape: f32[1,32], index: 6, kind: input, shape index: {}]
  %s7 = inlined_call_operand.hbm [shape: f32[2,8,32], index: 7, kind: output, shape index: {}]
  %s8 = sld [smem:[#allocation0]]
  $region73: #{tpu_custom_call.1} parent=0
    _
  %s10 = ssub.s32 1, %s8
  %s11 = scalar_select 0, %s10, %s8
  $region1: #{tpu_custom_call.1} parent=0
    #allocation2 [shape = 'u8[8192]{0}', space=vmem, size = 0x2000, scoped, tag = 'input window, operand 0']
    #allocation3 [shape = 's32[2]{0}', space=sflag, size = 0x8, scoped, tag = 'scoped memory for tpu_custom_call.1']
    #allocation4 [shape = 's32[2]{0}', space=sflag, size = 0x8, scoped, tag = 'scoped memory for tpu_custom_call.1']
    #allocation5 [shape = 'u8[8192]{0}', space=vmem, size = 0x2000, scoped, tag = 'input window, operand 1, single buffered']
    #allocation6 [shape = 's32[1]{0}', space=sflag, size = 0x4, scoped, tag = 'scoped memory for tpu_custom_call.1']
    #allocation7 [shape = 'u8[8192]{0}', space=vmem, size = 0x2000, scoped, tag = 'input window, operand 3, single buffered']
    #allocation8 [shape = 'u8[8192]{0}', space=vmem, size = 0x2000, scoped, tag = 'output window, operand 0']
    %12 = vsyncpa [#allocation3], 0
    %s13 = scalar_lea.sflag [#allocation3], 1
    %14 = vsyncpa %s13, 0
    %15 = vsyncpa [#allocation6], 0
    %16 = vsyncpa [#allocation4], 0
    %s17 = scalar_lea.sflag [#allocation4], 1
    %18 = vsyncpa %s17, 0
    loop: start=0, step=1, limit=4
    $region2: #{tpu_custom_call.1} parent=1 // loop_pre_header
      _
    $region3: #{tpu_custom_call.1} parent=1 // loop_header
      %s20 = sphi 0, %s24
      %p21 = scmp.ge.s32.totalorder %s20, 4
      %s30 = sphi 0, %s32
      %s33 = sphi 0, %s30
      %s34 = sphi 0, %s33
      %s50 = sphi 0, %s34
      %s54 = sphi 0, %s54
      %s56 = sphi 0, %s54
      %s57 = sphi 0, %s56
      %s71 = sphi 0, %s57
      %s75 = sphi 0, %s75
      %s77 = sphi 0, %s75
      %s78 = sphi 0, %s77
      %s92 = sphi 0, %s78
      %s96 = sphi 0, %s96
      %s98 = sphi 0, %s96
      %s99 = sphi 0, %s98
      %s113 = sphi 0, %s99
      %s117 = sphi 0, %s117
      %s119 = sphi 0, %s117
      %s120 = sphi 0, %s119
      %s134 = sphi 0, %s120
      %s138 = sphi 0, %s138
      %s140 = sphi 0, %s138
      %s141 = sphi 0, %s140
      %s155 = sphi 0, %s141
      %s159 = sphi 0, %s159
      %s161 = sphi 0, %s159
      %s162 = sphi 0, %s161
      %s176 = sphi 0, %s162
      %s182 = sphi 0, %s184
      %s185 = sphi 0, %s182
      %s186 = sphi 0, %s185
      %s202 = sphi 0, %s186
    $region4: #{tpu_custom_call.1} parent=1 // loop_header_branch
      %23 = sbr.rel (%p21) target = $region8
    $region5: #{tpu_custom_call.1} parent=1 // loop_body
      %s25 = ssub.s32 %s20, 1
      %s26 = ssub.s32 %s20, 2
      %s27 = sadd.s32 %s20, 1
      %s28 = ssub.s32 %s20, %s27
      %p29 = scmp.eq.s32.totalorder %s28, 0
      %s31 = sadd.s32 %s30, 1
      %s32 = scalar_select %p29, %s30, %s31
      %p35 = pneg %p29
      %p36 = scmp.eq.s32.totalorder %s20, 1
      %p37 = por %p35, %p36
      %p38 = scmp.ne.s32.totalorder %s30, %s33
      %p39 = scmp.eq.s32.totalorder %s20, 0
      %p40 = por %p38, %p39
      %p41 = scmp.ne.s32.totalorder %s30, %s33
      %p42 = scmp.eq.s32.totalorder %s25, 1
      %p43 = por %p41, %p42
      %p44 = scmp.ne.s32.totalorder %s33, %s34
      %p45 = scmp.eq.s32.totalorder %s25, 0
      %p46 = por %p44, %p45
      %p47 = scmp.ne.s32.totalorder %s33, %s34
      %p48 = scmp.eq.s32.totalorder %s26, 1
      %p49 = por %p47, %p48
      %p51 = scmp.ne.s32.totalorder %s34, %s50
      %p52 = scmp.eq.s32.totalorder %s26, 0
      %p53 = por %p51, %p52
      %s55 = sadd.s32 %s54, 1
      %p58 = scmp.eq.s32.totalorder %s20, 1
      %p59 = scmp.ne.s32.totalorder %s54, %s56
      %p60 = scmp.eq.s32.totalorder %s20, 0
      %p61 = por %p59, %p60
      %p62 = scmp.ne.s32.totalorder %s54, %s56
      %p63 = scmp.eq.s32.totalorder %s25, 1
      %p64 = por %p62, %p63
      %p65 = scmp.ne.s32.totalorder %s56, %s57
      %p66 = scmp.eq.s32.totalorder %s25, 0
      %p67 = por %p65, %p66
      %p68 = scmp.ne.s32.totalorder %s56, %s57
      %p69 = scmp.eq.s32.totalorder %s26, 1
      %p70 = por %p68, %p69
      %p72 = scmp.ne.s32.totalorder %s57, %s71
      %p73 = scmp.eq.s32.totalorder %s26, 0
      %p74 = por %p72, %p73
      %s76 = sadd.s32 %s75, 1
      %p79 = scmp.eq.s32.totalorder %s20, 1
      %p80 = scmp.ne.s32.totalorder %s75, %s77
      %p81 = scmp.eq.s32.totalorder %s20, 0
      %p82 = por %p80, %p81
      %p83 = scmp.ne.s32.totalorder %s75, %s77
      %p84 = scmp.eq.s32.totalorder %s25, 1
      %p85 = por %p83, %p84
      %p86 = scmp.ne.s32.totalorder %s77, %s78
      %p87 = scmp.eq.s32.totalorder %s25, 0
      %p88 = por %p86, %p87
      %p89 = scmp.ne.s32.totalorder %s77, %s78
      %p90 = scmp.eq.s32.totalorder %s26, 1
      %p91 = por %p89, %p90
      %p93 = scmp.ne.s32.totalorder %s78, %s92
      %p94 = scmp.eq.s32.totalorder %s26, 0
      %p95 = por %p93, %p94
      %s97 = sadd.s32 %s96, 1
      %p100 = scmp.eq.s32.totalorder %s20, 1
      %p101 = scmp.ne.s32.totalorder %s96, %s98
      %p102 = scmp.eq.s32.totalorder %s20, 0
      %p103 = por %p101, %p102
      %p104 = scmp.ne.s32.totalorder %s96, %s98
      %p105 = scmp.eq.s32.totalorder %s25, 1
      %p106 = por %p104, %p105
      %p107 = scmp.ne.s32.totalorder %s98, %s99
      %p108 = scmp.eq.s32.totalorder %s25, 0
      %p109 = por %p107, %p108
      %p110 = scmp.ne.s32.totalorder %s98, %s99
      %p111 = scmp.eq.s32.totalorder %s26, 1
      %p112 = por %p110, %p111
      %p114 = scmp.ne.s32.totalorder %s99, %s113
      %p115 = scmp.eq.s32.totalorder %s26, 0
      %p116 = por %p114, %p115
      %s118 = sadd.s32 %s117, 1
      %p121 = scmp.eq.s32.totalorder %s20, 1
      %p122 = scmp.ne.s32.totalorder %s117, %s119
      %p123 = scmp.eq.s32.totalorder %s20, 0
      %p124 = por %p122, %p123
      %p125 = scmp.ne.s32.totalorder %s117, %s119
      %p126 = scmp.eq.s32.totalorder %s25, 1
      %p127 = por %p125, %p126
      %p128 = scmp.ne.s32.totalorder %s119, %s120
      %p129 = scmp.eq.s32.totalorder %s25, 0
      %p130 = por %p128, %p129
      %p131 = scmp.ne.s32.totalorder %s119, %s120
      %p132 = scmp.eq.s32.totalorder %s26, 1
      %p133 = por %p131, %p132
      %p135 = scmp.ne.s32.totalorder %s120, %s134
      %p136 = scmp.eq.s32.totalorder %s26, 0
      %p137 = por %p135, %p136
      %s139 = sadd.s32 %s138, 1
      %p142 = scmp.eq.s32.totalorder %s20, 1
      %p143 = scmp.ne.s32.totalorder %s138, %s140
      %p144 = scmp.eq.s32.totalorder %s20, 0
      %p145 = por %p143, %p144
      %p146 = scmp.ne.s32.totalorder %s138, %s140
      %p147 = scmp.eq.s32.totalorder %s25, 1
      %p148 = por %p146, %p147
      %p149 = scmp.ne.s32.totalorder %s140, %s141
      %p150 = scmp.eq.s32.totalorder %s25, 0
      %p151 = por %p149, %p150
      %p152 = scmp.ne.s32.totalorder %s140, %s141
      %p153 = scmp.eq.s32.totalorder %s26, 1
      %p154 = por %p152, %p153
      %p156 = scmp.ne.s32.totalorder %s141, %s155
      %p157 = scmp.eq.s32.totalorder %s26, 0
      %p158 = por %p156, %p157
      %s160 = sadd.s32 %s159, 1
      %p163 = scmp.eq.s32.totalorder %s20, 1
      %p164 = scmp.ne.s32.totalorder %s159, %s161
      %p165 = scmp.eq.s32.totalorder %s20, 0
      %p166 = por %p164, %p165
      %p167 = scmp.ne.s32.totalorder %s159, %s161
      %p168 = scmp.eq.s32.totalorder %s25, 1
      %p169 = por %p167, %p168
      %p170 = scmp.ne.s32.totalorder %s161, %s162
      %p171 = scmp.eq.s32.totalorder %s25, 0
      %p172 = por %p170, %p171
      %p173 = scmp.ne.s32.totalorder %s161, %s162
      %p174 = scmp.eq.s32.totalorder %s26, 1
      %p175 = por %p173, %p174
      %p177 = scmp.ne.s32.totalorder %s162, %s176
      %p178 = scmp.eq.s32.totalorder %s26, 0
      %p179 = por %p177, %p178
      %s180 = ssub.s32 %s20, %s27
      %p181 = scmp.eq.s32.totalorder %s180, 0
      %s183 = sadd.s32 %s182, 1
      %s184 = scalar_select %p181, %s182, %s183
      %p187 = pneg %p181
      %p188 = scmp.eq.s32.totalorder %s20, 1
      %p189 = por %p187, %p188
      %p190 = scmp.ne.s32.totalorder %s182, %s185
      %p191 = scmp.eq.s32.totalorder %s20, 0
      %p192 = por %p190, %p191
      %p193 = scmp.ne.s32.totalorder %s182, %s185
      %p194 = scmp.eq.s32.totalorder %s25, 1
      %p195 = por %p193, %p194
      %p196 = scmp.ne.s32.totalorder %s185, %s186
      %p197 = scmp.eq.s32.totalorder %s25, 0
      %p198 = por %p196, %p197
      %p199 = scmp.ne.s32.totalorder %s185, %s186
      %p200 = scmp.eq.s32.totalorder %s26, 1
      %p201 = por %p199, %p200
      %p203 = scmp.ne.s32.totalorder %s186, %s202
      %p204 = scmp.eq.s32.totalorder %s26, 0
      %p205 = por %p203, %p204
      %p206 = scmp.le.s32.totalorder 1, %s20
      %p207 = scmp.lt.s32.totalorder %s20, 3
      %p208 = pnand %p206, %p207
      %p209 = pneg %p208
      // Predicated region
      $region9: #{tpu_custom_call.1} parent=5 // pred_check
        _
      $region10: #{tpu_custom_call.1} parent=5 // pred_check_branch
        %211 = sbr.rel (%p208) target = $region12
      $region11: #{tpu_custom_call.1} parent=5 // pred_region
        %s212 = ssub.s32 %s20, 1
        // Predicated region
        $region13: #{tpu_custom_call.1} parent=11 // pred_check
          %p213 = pneg %p67
        $region14: #{tpu_custom_call.1} parent=11 // pred_check_branch
          %215 = sbr.rel (%p213) target = $region16
        $region15: #{tpu_custom_call.1} parent=11 // pred_region
          %s217 = ssub.s32 256, 256
          %218 = vsyncadd [#allocation6], %s217
          %s219 = sshll.u32 [#allocation5], 4
          %s220 = int_to_ptr.vmem [resolvable:$true] %s219
          %225 = dma.hbm_to_vmem [thread:$0]  %s1, 256, %s220, [#allocation6], 64, 64, 4
        $region16: #{tpu_custom_call.1} parent=11 // pred_fallthru
          _
        // Predicated region
        $region17: #{tpu_custom_call.1} parent=11 // pred_check
          %p226 = pneg %p88
        $region18: #{tpu_custom_call.1} parent=11 // pred_check_branch
          %228 = sbr.rel (%p226) target = $region20
        $region19: #{tpu_custom_call.1} parent=11 // pred_region
          _
        $region20: #{tpu_custom_call.1} parent=11 // pred_fallthru
          _
        // Predicated region
        $region21: #{tpu_custom_call.1} parent=11 // pred_check
          %p229 = pneg %p109
        $region22: #{tpu_custom_call.1} parent=11 // pred_check_branch
          %231 = sbr.rel (%p229) target = $region24
        $region23: #{tpu_custom_call.1} parent=11 // pred_region
          %s233 = ssub.s32 256, 256
          %234 = vsyncadd [#allocation6], %s233
          %s235 = sshll.u32 [#allocation7], 4
          %s236 = int_to_ptr.vmem [resolvable:$true] %s235
          %241 = dma.hbm_to_vmem [thread:$0]  %s3, 256, %s236, [#allocation6], 64, 64, 4
        $region24: #{tpu_custom_call.1} parent=11 // pred_fallthru
          _
        // Predicated region
        $region25: #{tpu_custom_call.1} parent=11 // pred_check
          %p242 = pneg %p130
        $region26: #{tpu_custom_call.1} parent=11 // pred_check_branch
          %244 = sbr.rel (%p242) target = $region28
        $region27: #{tpu_custom_call.1} parent=11 // pred_region
          _
        $region28: #{tpu_custom_call.1} parent=11 // pred_fallthru
          _
        // Predicated region
        $region29: #{tpu_custom_call.1} parent=11 // pred_check
          %p245 = pneg %p151
        $region30: #{tpu_custom_call.1} parent=11 // pred_check_branch
          %247 = sbr.rel (%p245) target = $region32
        $region31: #{tpu_custom_call.1} parent=11 // pred_region
          _
        $region32: #{tpu_custom_call.1} parent=11 // pred_fallthru
          _
        // Predicated region
        $region33: #{tpu_custom_call.1} parent=11 // pred_check
          %p248 = pneg %p172
        $region34: #{tpu_custom_call.1} parent=11 // pred_check_branch
          %250 = sbr.rel (%p248) target = $region36
        $region35: #{tpu_custom_call.1} parent=11 // pred_region
          _
        $region36: #{tpu_custom_call.1} parent=11 // pred_fallthru
          _
      $region12: #{tpu_custom_call.1} parent=5 // pred_fallthru
        _
      %p251 = scmp.lt.s32.totalorder %s20, 2
      // Predicated region
      $region37: #{tpu_custom_call.1} parent=5 // pred_check
        %p252 = pneg %p251
      $region38: #{tpu_custom_call.1} parent=5 // pred_check_branch
        %254 = sbr.rel (%p252) target = $region40
      $region39: #{tpu_custom_call.1} parent=5 // pred_region
        // Predicated region
        $region41: #{tpu_custom_call.1} parent=39 // pred_check
          %p255 = pneg %p40
        $region42: #{tpu_custom_call.1} parent=39 // pred_check_branch
          %257 = sbr.rel (%p255) target = $region44
        $region43: #{tpu_custom_call.1} parent=39 // pred_region
          %s258 = sand.u32 %s30, 1
          %s259 = scalar_lea.sflag [#allocation3], %s258
          %s260 = sand.u32 %s30, 1
          %s261 = smul.addr %s260, 8
          %s262 = scalar_lea.vmem [#allocation2], %s261
          %s264 = ssub.s32 128, 128
          %265 = vsyncadd %s259, %s264
          %s266 = smul.addr %s20, 128
          %s267 = scalar_lea.hbm %s0, %s266
          %s269 = sshll.u32 %s262, 4
          %s270 = int_to_ptr.vmem [resolvable:$true] %s269
          %272 = dma.hbm_to_vmem [thread:$0]  %s267, 128, %s270, %s259
        $region44: #{tpu_custom_call.1} parent=39 // pred_fallthru
          _
      $region40: #{tpu_custom_call.1} parent=5 // pred_fallthru
        _
      %p273 = scmp.le.s32.totalorder 1, %s20
      %p274 = scmp.lt.s32.totalorder %s20, 3
      %p275 = pnand %p273, %p274
      %p276 = pneg %p275
      // Predicated region
      $region45: #{tpu_custom_call.1} parent=5 // pred_check
        _
      $region46: #{tpu_custom_call.1} parent=5 // pred_check_branch
        %278 = sbr.rel (%p275) target = $region48
      $region47: #{tpu_custom_call.1} parent=5 // pred_region
        %s279 = ssub.s32 %s20, 1
        %s280 = sand.u32 %s33, 1
        %s281 = scalar_lea.sflag [#allocation3], %s280
        %s282 = sand.u32 %s33, 1
        %s283 = smul.addr %s282, 8
        %s284 = scalar_lea.vmem [#allocation2], %s283
        // Predicated region
        $region49: #{tpu_custom_call.1} parent=47 // pred_check
          %p285 = pneg %p46
        $region50: #{tpu_custom_call.1} parent=47 // pred_check_branch
          %287 = sbr.rel (%p285) target = $region52
        $region51: #{tpu_custom_call.1} parent=47 // pred_region
          %288 = dma.done %s281, 128
        $region52: #{tpu_custom_call.1} parent=47 // pred_fallthru
          _
        // Predicated region
        $region53: #{tpu_custom_call.1} parent=47 // pred_check
          %p289 = pneg %p67
        $region54: #{tpu_custom_call.1} parent=47 // pred_check_branch
          %291 = sbr.rel (%p289) target = $region56
        $region55: #{tpu_custom_call.1} parent=47 // pred_region
          %292 = dma.done [#allocation6], 256
        $region56: #{tpu_custom_call.1} parent=47 // pred_fallthru
          _
        // Predicated region
        $region57: #{tpu_custom_call.1} parent=47 // pred_check
          %p293 = pneg %p109
        $region58: #{tpu_custom_call.1} parent=47 // pred_check_branch
          %295 = sbr.rel (%p293) target = $region60
        $region59: #{tpu_custom_call.1} parent=47 // pred_region
          %296 = dma.done [#allocation6], 256
        $region60: #{tpu_custom_call.1} parent=47 // pred_fallthru
          _
        %s297 = sand.u32 %s33, 1
        %s298 = scalar_lea.sflag [#allocation3], %s297
        %s299 = sand.u32 %s33, 1
        %s300 = smul.addr %s299, 8
        %s301 = scalar_lea.vmem [#allocation2], %s300
        %p302 = pneg %p46
        %p303 = pneg %p43
        %p304 = pneg %p67
        %p305 = pneg %p64
        %p306 = pneg %p88
        %p307 = pneg %p85
        %p308 = pneg %p109
        %p309 = pneg %p106
        %p310 = pneg %p130
        %p311 = pneg %p127
        %p312 = pneg %p151
        %p313 = pneg %p148
        %p314 = pneg %p172
        %p315 = pneg %p169
        %p316 = pneg %p198
        %p317 = pneg %p195
        %s318 = sand.u32 %s185, 1
        %s319 = scalar_lea.sflag [#allocation4], %s318
        %s320 = sand.u32 %s185, 1
        %s321 = smul.addr %s320, 8
        %s322 = scalar_lea.vmem [#allocation8], %s321
        %v324 = vld [vmem:[%s284] sm:$0xff]
        %v325 = vpack.c.bf16 %v324, %v324
        %v326 = vld [vmem:[#allocation5] sm:$0xf]
        %v327 = vld [vmem:[#allocation5 + $0x4] sm:$0xf]
        %v328 = vld [vmem:[#allocation5 + $0x8] sm:$0xf]
        %v329 = vld [vmem:[#allocation5 + $0xc] sm:$0xf]
        %v330 = vld [vmem:[%s2] sm:$0x1]
        %v332 = vlaneseq
        %v333 = vshrl.u32 %v332, 7
        %v334 = vsub.s32 0, %v333
        %v335 = vrot.slane %v330, %v334
        %v341 = vunpack.c.l.b16 %v326
        %v342 = vunpack.c.l.b16 %v327
        %v343 = vunpack.c.l.b16 %v328
        %v344 = vunpack.c.l.b16 %v329
        %v345 = vpack.c.b16 %v342, %v341
        %v346 = vpack.c.b16 %v344, %v343
        %vm349 = vcmask 261120
        %v351 = vsel %vm349, %v325, 0
        %353 = vmatprep.subr.bf16.mxu0 0
        %354 = vmatpush1.bf16.msra.mxu0 %v345
        %355 = vmatprep.subr.bf16.mxu0 0
        %356 = vmatpush1.bf16.msra.mxu0 %v346
        %357 = vmatprep.subr.bf16.mxu0 0
        %358 = vmatpush1.bf16.msra.mxu0 0
        %359 = vmatprep.subr.bf16.mxu0 0
        %360 = vmatpush1.bf16.msra.mxu0 0
        %361 = vmatprep.subr.bf16.mxu0 0
        %362 = vmatpush1.bf16.msra.mxu0 0
        %363 = vmatprep.subr.bf16.mxu0 0
        %364 = vmatpush1.bf16.msra.mxu0 0
        %365 = vmatprep.subr.bf16.mxu0 0
        %366 = vmatpush1.bf16.msra.mxu0 0
        %367 = vmatprep.subr.bf16.mxu0 0
        %368 = vmatpush1.bf16.msra.mxu0 0
        %369 = vmatprep.subr.bf16.mxu0 0
        %370 = vmatpush1.bf16.msra.mxu0 0
        %371 = vmatprep.subr.bf16.mxu0 0
        %372 = vmatpush1.bf16.msra.mxu0 0
        %373 = vmatprep.subr.bf16.mxu0 0
        %374 = vmatpush1.bf16.msra.mxu0 0
        %375 = vmatprep.subr.bf16.mxu0 0
        %376 = vmatpush1.bf16.msra.mxu0 0
        %377 = vmatprep.subr.bf16.mxu0 0
        %378 = vmatpush1.bf16.msra.mxu0 0
        %379 = vmatprep.subr.bf16.mxu0 0
        %380 = vmatpush1.bf16.msra.mxu0 0
        %381 = vmatprep.subr.bf16.mxu0 0
        %382 = vmatpush1.bf16.msra.mxu0 0
        %383 = vmatprep.subr.bf16.mxu0 0
        %384 = vmatpush1.bf16.msra.mxu0 0
        %385 = vmatprep.mubr.bf16.mxu0 0
        %386 = vmatmul.mubr.bf16.gmra.mrb[0].mxu0 %v351
        %v387 = vpop.f32.mrb[0].mxu0
        %v388 = vadd.f32 %v335, %v387
        %v389 = vpop.f32.mrb[0].mxu0
        %v390 = vpop.f32.mrb[0].mxu0
        %v391 = vpop.f32.mrb[0].mxu0
        %392 = vdwg.mxu0
        %v393 = vpack.c.bf16 %v388, %v388
        %395 = vrot.lane.b32.xlu0 %v393, 96
        %v396 = vpop.permute.xlu0 %395
        %vm397 = vcmask 64512
        %v399 = vsel %vm397, %v393, 0
        %v402 = vsel %vm397, %v396, 0
        %404 = vmatprep.subr.bf16.mxu0 0
        %405 = vmatpush1.bf16.xpose.msra.mxu0 %v402
        %406 = vmatprep.subr.bf16.mxu0 0
        %407 = vmatpush1.bf16.xpose.msra.mxu0 0
        %408 = vmatprep.subr.bf16.mxu0 0
        %409 = vmatpush1.bf16.xpose.msra.mxu0 0
        %410 = vmatprep.subr.bf16.mxu0 0
        %411 = vmatpush1.bf16.xpose.msra.mxu0 0
        %412 = vmatprep.subr.bf16.mxu0 0
        %413 = vmatpush1.bf16.xpose.msra.mxu0 0
        %414 = vmatprep.subr.bf16.mxu0 0
        %415 = vmatpush1.bf16.xpose.msra.mxu0 0
        %416 = vmatprep.subr.bf16.mxu0 0
        %417 = vmatpush1.bf16.xpose.msra.mxu0 0
        %418 = vmatprep.subr.bf16.mxu0 0
        %419 = vmatpush1.bf16.xpose.msra.mxu0 0
        %420 = vmatprep.subr.bf16.mxu0 0
        %421 = vmatpush1.bf16.xpose.msra.mxu0 0
        %422 = vmatprep.subr.bf16.mxu0 0
        %423 = vmatpush1.bf16.xpose.msra.mxu0 0
        %424 = vmatprep.subr.bf16.mxu0 0
        %425 = vmatpush1.bf16.xpose.msra.mxu0 0
        %426 = vmatprep.subr.bf16.mxu0 0
        %427 = vmatpush1.bf16.xpose.msra.mxu0 0
        %428 = vmatprep.subr.bf16.mxu0 0
        %429 = vmatpush1.bf16.xpose.msra.mxu0 0
        %430 = vmatprep.subr.bf16.mxu0 0
        %431 = vmatpush1.bf16.xpose.msra.mxu0 0
        %432 = vmatprep.subr.bf16.mxu0 0
        %433 = vmatpush1.bf16.xpose.msra.mxu0 0
        %434 = vmatprep.subr.bf16.mxu0 0
        %435 = vmatpush1.bf16.xpose.msra.mxu0 0
        %436 = vmatprep.mubr.bf16.mxu0 0
        %437 = vmatmul.mubr.bf16.gmra.mrb[0].mxu0 %v399
        %v438 = vpop.f32.mrb[0].mxu0
        %v439 = vadd.f32 0.0, %v438
        %v440 = vpop.f32.mrb[0].mxu0
        %v441 = vpop.f32.mrb[0].mxu0
        %v442 = vpop.f32.mrb[0].mxu0
        %443 = vdwg.mxu0
        %v444 = vsel %vm397, %v439, -inf
        %445 = vmax.xlane.f32.xlu0 %v444
        %v446 = vpop.xlane.xlu0 %445
        %v447 = vsub.f32 %v439, %v446
        %v448 = vmul.f32 %v447, 1.442695
        %v449 = vpow.pop %v448
        %v450 = vsel %vm397, %v449, 0.0
        %451 = vadd.xlane.f32.xlu0 %v450
        %v452 = vpop.xlane.xlu0 %451
        %v453 = vrcp.pop %v452
        %v454 = vmul.f32 %v449, %v453
        %v455 = vpack.c.bf16 %v454, %v454
        %456 = vrot.lane.b32.xlu0 %v393, 64
        %v457 = vpop.permute.xlu0 %456
        %v459 = vsel %vm397, %v455, 0
        %vm461 = vcmask 1043456
        %v463 = vsel %vm461, %v457, 0
        %465 = vmatprep.subr.bf16.mxu0 0
        %466 = vmatpush1.bf16.msra.mxu0 %v463
        %467 = vmatprep.subr.bf16.mxu0 0
        %468 = vmatpush1.bf16.msra.mxu0 0
        %469 = vmatprep.subr.bf16.mxu0 0
        %470 = vmatpush1.bf16.msra.mxu0 0
        %471 = vmatprep.subr.bf16.mxu0 0
        %472 = vmatpush1.bf16.msra.mxu0 0
        %473 = vmatprep.subr.bf16.mxu0 0
        %474 = vmatpush1.bf16.msra.mxu0 0
        %475 = vmatprep.subr.bf16.mxu0 0
        %476 = vmatpush1.bf16.msra.mxu0 0
        %477 = vmatprep.subr.bf16.mxu0 0
        %478 = vmatpush1.bf16.msra.mxu0 0
        %479 = vmatprep.subr.bf16.mxu0 0
        %480 = vmatpush1.bf16.msra.mxu0 0
        %481 = vmatprep.subr.bf16.mxu0 0
        %482 = vmatpush1.bf16.msra.mxu0 0
        %483 = vmatprep.subr.bf16.mxu0 0
        %484 = vmatpush1.bf16.msra.mxu0 0
        %485 = vmatprep.subr.bf16.mxu0 0
        %486 = vmatpush1.bf16.msra.mxu0 0
        %487 = vmatprep.subr.bf16.mxu0 0
        %488 = vmatpush1.bf16.msra.mxu0 0
        %489 = vmatprep.subr.bf16.mxu0 0
        %490 = vmatpush1.bf16.msra.mxu0 0
        %491 = vmatprep.subr.bf16.mxu0 0
        %492 = vmatpush1.bf16.msra.mxu0 0
        %493 = vmatprep.subr.bf16.mxu0 0
        %494 = vmatpush1.bf16.msra.mxu0 0
        %495 = vmatprep.subr.bf16.mxu0 0
        %496 = vmatpush1.bf16.msra.mxu0 0
        %497 = vmatprep.mubr.bf16.mxu0 0
        %498 = vmatmul.mubr.bf16.gmra.mrb[0].mxu0 %v459
        %v499 = vpop.f32.mrb[0].mxu0
        %v500 = vadd.f32 0.0, %v499
        %v501 = vpop.f32.mrb[0].mxu0
        %v502 = vpop.f32.mrb[0].mxu0
        %v503 = vpop.f32.mrb[0].mxu0
        %504 = vdwg.mxu0
        %505 = vrot.lane.b32.xlu0 %v393, 120
        %v506 = vpop.permute.xlu0 %505
        %507 = vrot.lane.b32.xlu0 %v393, 88
        %v508 = vpop.permute.xlu0 %507
        %v510 = vsel %vm397, %v506, 0
        %v513 = vsel %vm397, %v508, 0
        %515 = vmatprep.subr.bf16.mxu0 0
        %516 = vmatpush1.bf16.xpose.msra.mxu0 %v513
        %517 = vmatprep.subr.bf16.mxu0 0
        %518 = vmatpush1.bf16.xpose.msra.mxu0 0
        %519 = vmatprep.subr.bf16.mxu0 0
        %520 = vmatpush1.bf16.xpose.msra.mxu0 0
        %521 = vmatprep.subr.bf16.mxu0 0
        %522 = vmatpush1.bf16.xpose.msra.mxu0 0
        %523 = vmatprep.subr.bf16.mxu0 0
        %524 = vmatpush1.bf16.xpose.msra.mxu0 0
        %525 = vmatprep.subr.bf16.mxu0 0
        %526 = vmatpush1.bf16.xpose.msra.mxu0 0
        %527 = vmatprep.subr.bf16.mxu0 0
        %528 = vmatpush1.bf16.xpose.msra.mxu0 0
        %529 = vmatprep.subr.bf16.mxu0 0
        %530 = vmatpush1.bf16.xpose.msra.mxu0 0
        %531 = vmatprep.subr.bf16.mxu0 0
        %532 = vmatpush1.bf16.xpose.msra.mxu0 0
        %533 = vmatprep.subr.bf16.mxu0 0
        %534 = vmatpush1.bf16.xpose.msra.mxu0 0
        %535 = vmatprep.subr.bf16.mxu0 0
        %536 = vmatpush1.bf16.xpose.msra.mxu0 0
        %537 = vmatprep.subr.bf16.mxu0 0
        %538 = vmatpush1.bf16.xpose.msra.mxu0 0
        %539 = vmatprep.subr.bf16.mxu0 0
        %540 = vmatpush1.bf16.xpose.msra.mxu0 0
        %541 = vmatprep.subr.bf16.mxu0 0
        %542 = vmatpush1.bf16.xpose.msra.mxu0 0
        %543 = vmatprep.subr.bf16.mxu0 0
        %544 = vmatpush1.bf16.xpose.msra.mxu0 0
        %545 = vmatprep.subr.bf16.mxu0 0
        %546 = vmatpush1.bf16.xpose.msra.mxu0 0
        %547 = vmatprep.mubr.bf16.mxu0 0
        %548 = vmatmul.mubr.bf16.gmra.mrb[0].mxu0 %v510
        %v549 = vpop.f32.mrb[0].mxu0
        %v550 = vadd.f32 0.0, %v549
        %v551 = vpop.f32.mrb[0].mxu0
        %v552 = vpop.f32.mrb[0].mxu0
        %v553 = vpop.f32.mrb[0].mxu0
        %554 = vdwg.mxu0
        %v555 = vsel %vm397, %v550, -inf
        %556 = vmax.xlane.f32.xlu0 %v555
        %v557 = vpop.xlane.xlu0 %556
        %v558 = vsub.f32 %v550, %v557
        %v559 = vmul.f32 %v558, 1.442695
        %v560 = vpow.pop %v559
        %v561 = vsel %vm397, %v560, 0.0
        %562 = vadd.xlane.f32.xlu0 %v561
        %v563 = vpop.xlane.xlu0 %562
        %v564 = vrcp.pop %v563
        %v565 = vmul.f32 %v560, %v564
        %v566 = vpack.c.bf16 %v565, %v565
        %567 = vrot.lane.b32.xlu0 %v393, 56
        %v568 = vpop.permute.xlu0 %567
        %v570 = vsel %vm397, %v566, 0
        %v573 = vsel %vm461, %v568, 0
        %575 = vmatprep.subr.bf16.mxu0 0
        %576 = vmatpush1.bf16.msra.mxu0 %v573
        %577 = vmatprep.subr.bf16.mxu0 0
        %578 = vmatpush1.bf16.msra.mxu0 0
        %579 = vmatprep.subr.bf16.mxu0 0
        %580 = vmatpush1.bf16.msra.mxu0 0
        %581 = vmatprep.subr.bf16.mxu0 0
        %582 = vmatpush1.bf16.msra.mxu0 0
        %583 = vmatprep.subr.bf16.mxu0 0
        %584 = vmatpush1.bf16.msra.mxu0 0
        %585 = vmatprep.subr.bf16.mxu0 0
        %586 = vmatpush1.bf16.msra.mxu0 0
        %587 = vmatprep.subr.bf16.mxu0 0
        %588 = vmatpush1.bf16.msra.mxu0 0
        %589 = vmatprep.subr.bf16.mxu0 0
        %590 = vmatpush1.bf16.msra.mxu0 0
        %591 = vmatprep.subr.bf16.mxu0 0
        %592 = vmatpush1.bf16.msra.mxu0 0
        %593 = vmatprep.subr.bf16.mxu0 0
        %594 = vmatpush1.bf16.msra.mxu0 0
        %595 = vmatprep.subr.bf16.mxu0 0
        %596 = vmatpush1.bf16.msra.mxu0 0
        %597 = vmatprep.subr.bf16.mxu0 0
        %598 = vmatpush1.bf16.msra.mxu0 0
        %599 = vmatprep.subr.bf16.mxu0 0
        %600 = vmatpush1.bf16.msra.mxu0 0
        %601 = vmatprep.subr.bf16.mxu0 0
        %602 = vmatpush1.bf16.msra.mxu0 0
        %603 = vmatprep.subr.bf16.mxu0 0
        %604 = vmatpush1.bf16.msra.mxu0 0
        %605 = vmatprep.subr.bf16.mxu0 0
        %606 = vmatpush1.bf16.msra.mxu0 0
        %607 = vmatprep.mubr.bf16.mxu0 0
        %608 = vmatmul.mubr.bf16.gmra.mrb[0].mxu0 %v570
        %v609 = vpop.f32.mrb[0].mxu0
        %v610 = vadd.f32 0.0, %v609
        %v611 = vpop.f32.mrb[0].mxu0
        %v612 = vpop.f32.mrb[0].mxu0
        %v613 = vpop.f32.mrb[0].mxu0
        %614 = vdwg.mxu0
        %615 = vrot.lane.b32.xlu0 %v393, 112
        %v616 = vpop.permute.xlu0 %615
        %617 = vrot.lane.b32.xlu0 %v393, 80
        %v618 = vpop.permute.xlu0 %617
        %v620 = vsel %vm397, %v616, 0
        %v623 = vsel %vm397, %v618, 0
        %625 = vmatprep.subr.bf16.mxu0 0
        %626 = vmatpush1.bf16.xpose.msra.mxu0 %v623
        %627 = vmatprep.subr.bf16.mxu0 0
        %628 = vmatpush1.bf16.xpose.msra.mxu0 0
        %629 = vmatprep.subr.bf16.mxu0 0
        %630 = vmatpush1.bf16.xpose.msra.mxu0 0
        %631 = vmatprep.subr.bf16.mxu0 0
        %632 = vmatpush1.bf16.xpose.msra.mxu0 0
        %633 = vmatprep.subr.bf16.mxu0 0
        %634 = vmatpush1.bf16.xpose.msra.mxu0 0
        %635 = vmatprep.subr.bf16.mxu0 0
        %636 = vmatpush1.bf16.xpose.msra.mxu0 0
        %637 = vmatprep.subr.bf16.mxu0 0
        %638 = vmatpush1.bf16.xpose.msra.mxu0 0
        %639 = vmatprep.subr.bf16.mxu0 0
        %640 = vmatpush1.bf16.xpose.msra.mxu0 0
        %641 = vmatprep.subr.bf16.mxu0 0
        %642 = vmatpush1.bf16.xpose.msra.mxu0 0
        %643 = vmatprep.subr.bf16.mxu0 0
        %644 = vmatpush1.bf16.xpose.msra.mxu0 0
        %645 = vmatprep.subr.bf16.mxu0 0
        %646 = vmatpush1.bf16.xpose.msra.mxu0 0
        %647 = vmatprep.subr.bf16.mxu0 0
        %648 = vmatpush1.bf16.xpose.msra.mxu0 0
        %649 = vmatprep.subr.bf16.mxu0 0
        %650 = vmatpush1.bf16.xpose.msra.mxu0 0
        %651 = vmatprep.subr.bf16.mxu0 0
        %652 = vmatpush1.bf16.xpose.msra.mxu0 0
        %653 = vmatprep.subr.bf16.mxu0 0
        %654 = vmatpush1.bf16.xpose.msra.mxu0 0
        %655 = vmatprep.subr.bf16.mxu0 0
        %656 = vmatpush1.bf16.xpose.msra.mxu0 0
        %657 = vmatprep.mubr.bf16.mxu0 0
        %658 = vmatmul.mubr.bf16.gmra.mrb[0].mxu0 %v620
        %v659 = vpop.f32.mrb[0].mxu0
        %v660 = vadd.f32 0.0, %v659
        %v661 = vpop.f32.mrb[0].mxu0
        %v662 = vpop.f32.mrb[0].mxu0
        %v663 = vpop.f32.mrb[0].mxu0
        %664 = vdwg.mxu0
        %v665 = vsel %vm397, %v660, -inf
        %666 = vmax.xlane.f32.xlu0 %v665
        %v667 = vpop.xlane.xlu0 %666
        %v668 = vsub.f32 %v660, %v667
        %v669 = vmul.f32 %v668, 1.442695
        %v670 = vpow.pop %v669
        %v671 = vsel %vm397, %v670, 0.0
        %672 = vadd.xlane.f32.xlu0 %v671
        %v673 = vpop.xlane.xlu0 %672
        %v674 = vrcp.pop %v673
        %v675 = vmul.f32 %v670, %v674
        %v676 = vpack.c.bf16 %v675, %v675
        %677 = vrot.lane.b32.xlu0 %v393, 48
        %v678 = vpop.permute.xlu0 %677
        %v680 = vsel %vm397, %v676, 0
        %v683 = vsel %vm461, %v678, 0
        %685 = vmatprep.subr.bf16.mxu0 0
        %686 = vmatpush1.bf16.msra.mxu0 %v683
        %687 = vmatprep.subr.bf16.mxu0 0
        %688 = vmatpush1.bf16.msra.mxu0 0
        %689 = vmatprep.subr.bf16.mxu0 0
        %690 = vmatpush1.bf16.msra.mxu0 0
        %691 = vmatprep.subr.bf16.mxu0 0
        %692 = vmatpush1.bf16.msra.mxu0 0
        %693 = vmatprep.subr.bf16.mxu0 0
        %694 = vmatpush1.bf16.msra.mxu0 0
        %695 = vmatprep.subr.bf16.mxu0 0
        %696 = vmatpush1.bf16.msra.mxu0 0
        %697 = vmatprep.subr.bf16.mxu0 0
        %698 = vmatpush1.bf16.msra.mxu0 0
        %699 = vmatprep.subr.bf16.mxu0 0
        %700 = vmatpush1.bf16.msra.mxu0 0
        %701 = vmatprep.subr.bf16.mxu0 0
        %702 = vmatpush1.bf16.msra.mxu0 0
        %703 = vmatprep.subr.bf16.mxu0 0
        %704 = vmatpush1.bf16.msra.mxu0 0
        %705 = vmatprep.subr.bf16.mxu0 0
        %706 = vmatpush1.bf16.msra.mxu0 0
        %707 = vmatprep.subr.bf16.mxu0 0
        %708 = vmatpush1.bf16.msra.mxu0 0
        %709 = vmatprep.subr.bf16.mxu0 0
        %710 = vmatpush1.bf16.msra.mxu0 0
        %711 = vmatprep.subr.bf16.mxu0 0
        %712 = vmatpush1.bf16.msra.mxu0 0
        %713 = vmatprep.subr.bf16.mxu0 0
        %714 = vmatpush1.bf16.msra.mxu0 0
        %715 = vmatprep.subr.bf16.mxu0 0
        %716 = vmatpush1.bf16.msra.mxu0 0
        %717 = vmatprep.mubr.bf16.mxu0 0
        %718 = vmatmul.mubr.bf16.gmra.mrb[0].mxu0 %v680
        %v719 = vpop.f32.mrb[0].mxu0
        %v720 = vadd.f32 0.0, %v719
        %v721 = vpop.f32.mrb[0].mxu0
        %v722 = vpop.f32.mrb[0].mxu0
        %v723 = vpop.f32.mrb[0].mxu0
        %724 = vdwg.mxu0
        %725 = vrot.lane.b32.xlu0 %v393, 104
        %v726 = vpop.permute.xlu0 %725
        %727 = vrot.lane.b32.xlu0 %v393, 72
        %v728 = vpop.permute.xlu0 %727
        %v730 = vsel %vm397, %v726, 0
        %v733 = vsel %vm397, %v728, 0
        %735 = vmatprep.subr.bf16.mxu0 0
        %736 = vmatpush1.bf16.xpose.msra.mxu0 %v733
        %737 = vmatprep.subr.bf16.mxu0 0
        %738 = vmatpush1.bf16.xpose.msra.mxu0 0
        %739 = vmatprep.subr.bf16.mxu0 0
        %740 = vmatpush1.bf16.xpose.msra.mxu0 0
        %741 = vmatprep.subr.bf16.mxu0 0
        %742 = vmatpush1.bf16.xpose.msra.mxu0 0
        %743 = vmatprep.subr.bf16.mxu0 0
        %744 = vmatpush1.bf16.xpose.msra.mxu0 0
        %745 = vmatprep.subr.bf16.mxu0 0
        %746 = vmatpush1.bf16.xpose.msra.mxu0 0
        %747 = vmatprep.subr.bf16.mxu0 0
        %748 = vmatpush1.bf16.xpose.msra.mxu0 0
        %749 = vmatprep.subr.bf16.mxu0 0
        %750 = vmatpush1.bf16.xpose.msra.mxu0 0
        %751 = vmatprep.subr.bf16.mxu0 0
        %752 = vmatpush1.bf16.xpose.msra.mxu0 0
        %753 = vmatprep.subr.bf16.mxu0 0
        %754 = vmatpush1.bf16.xpose.msra.mxu0 0
        %755 = vmatprep.subr.bf16.mxu0 0
        %756 = vmatpush1.bf16.xpose.msra.mxu0 0
        %757 = vmatprep.subr.bf16.mxu0 0
        %758 = vmatpush1.bf16.xpose.msra.mxu0 0
        %759 = vmatprep.subr.bf16.mxu0 0
        %760 = vmatpush1.bf16.xpose.msra.mxu0 0
        %761 = vmatprep.subr.bf16.mxu0 0
        %762 = vmatpush1.bf16.xpose.msra.mxu0 0
        %763 = vmatprep.subr.bf16.mxu0 0
        %764 = vmatpush1.bf16.xpose.msra.mxu0 0
        %765 = vmatprep.subr.bf16.mxu0 0
        %766 = vmatpush1.bf16.xpose.msra.mxu0 0
        %767 = vmatprep.mubr.bf16.mxu0 0
        %768 = vmatmul.mubr.bf16.gmra.mrb[0].mxu0 %v730
        %v769 = vpop.f32.mrb[0].mxu0
        %v770 = vadd.f32 0.0, %v769
        %v771 = vpop.f32.mrb[0].mxu0
        %v772 = vpop.f32.mrb[0].mxu0
        %v773 = vpop.f32.mrb[0].mxu0
        %774 = vdwg.mxu0
        %v775 = vsel %vm397, %v770, -inf
        %776 = vmax.xlane.f32.xlu0 %v775
        %v777 = vpop.xlane.xlu0 %776
        %v778 = vsub.f32 %v770, %v777
        %v779 = vmul.f32 %v778, 1.442695
        %v780 = vpow.pop %v779
        %v781 = vsel %vm397, %v780, 0.0
        %782 = vadd.xlane.f32.xlu0 %v781
        %v783 = vpop.xlane.xlu0 %782
        %v784 = vrcp.pop %v783
        %v785 = vmul.f32 %v780, %v784
        %v786 = vpack.c.bf16 %v785, %v785
        %787 = vrot.lane.b32.xlu0 %v393, 40
        %v788 = vpop.permute.xlu0 %787
        %v790 = vsel %vm397, %v786, 0
        %v793 = vsel %vm461, %v788, 0
        %795 = vmatprep.subr.bf16.mxu0 0
        %796 = vmatpush1.bf16.msra.mxu0 %v793
        %797 = vmatprep.subr.bf16.mxu0 0
        %798 = vmatpush1.bf16.msra.mxu0 0
        %799 = vmatprep.subr.bf16.mxu0 0
        %800 = vmatpush1.bf16.msra.mxu0 0
        %801 = vmatprep.subr.bf16.mxu0 0
        %802 = vmatpush1.bf16.msra.mxu0 0
        %803 = vmatprep.subr.bf16.mxu0 0
        %804 = vmatpush1.bf16.msra.mxu0 0
        %805 = vmatprep.subr.bf16.mxu0 0
        %806 = vmatpush1.bf16.msra.mxu0 0
        %807 = vmatprep.subr.bf16.mxu0 0
        %808 = vmatpush1.bf16.msra.mxu0 0
        %809 = vmatprep.subr.bf16.mxu0 0
        %810 = vmatpush1.bf16.msra.mxu0 0
        %811 = vmatprep.subr.bf16.mxu0 0
        %812 = vmatpush1.bf16.msra.mxu0 0
        %813 = vmatprep.subr.bf16.mxu0 0
        %814 = vmatpush1.bf16.msra.mxu0 0
        %815 = vmatprep.subr.bf16.mxu0 0
        %816 = vmatpush1.bf16.msra.mxu0 0
        %817 = vmatprep.subr.bf16.mxu0 0
        %818 = vmatpush1.bf16.msra.mxu0 0
        %819 = vmatprep.subr.bf16.mxu0 0
        %820 = vmatpush1.bf16.msra.mxu0 0
        %821 = vmatprep.subr.bf16.mxu0 0
        %822 = vmatpush1.bf16.msra.mxu0 0
        %823 = vmatprep.subr.bf16.mxu0 0
        %824 = vmatpush1.bf16.msra.mxu0 0
        %825 = vmatprep.subr.bf16.mxu0 0
        %826 = vmatpush1.bf16.msra.mxu0 0
        %827 = vmatprep.mubr.bf16.mxu0 0
        %828 = vmatmul.mubr.bf16.gmra.mrb[0].mxu0 %v790
        %v829 = vpop.f32.mrb[0].mxu0
        %v830 = vadd.f32 0.0, %v829
        %v831 = vpop.f32.mrb[0].mxu0
        %v832 = vpop.f32.mrb[0].mxu0
        %v833 = vpop.f32.mrb[0].mxu0
        %834 = vdwg.mxu0
        %836 = vrot.lane.b32.xlu0 %v610, 8
        %v837 = vpop.permute.xlu0 %836
        %840 = vrot.lane.b32.xlu0 %v720, 16
        %v841 = vpop.permute.xlu0 %840
        %844 = vrot.lane.b32.xlu0 %v830, 24
        %v845 = vpop.permute.xlu0 %844
        %v847 = vsel %vm397, %v500, %v837
        %vm848 = vcmask 130048
        %v849 = vsel %vm848, %v847, %v841
        %vm850 = vcmask 195584
        %v851 = vsel %vm850, %v849, %v845
        %v852 = vpack.c.bf16 %v851, %v851
        %v853 = vld [vmem:[#allocation7] sm:$0xf]
        %v854 = vld [vmem:[#allocation7 + $0x4] sm:$0xf]
        %v855 = vld [vmem:[#allocation7 + $0x8] sm:$0xf]
        %v856 = vld [vmem:[#allocation7 + $0xc] sm:$0xf]
        %v857 = vld [vmem:[%s4] sm:$0x1]
        %v859 = vlaneseq
        %v860 = vshrl.u32 %v859, 7
        %v861 = vsub.s32 0, %v860
        %v862 = vrot.slane %v857, %v861
        %v868 = vunpack.c.l.b16 %v853
        %v869 = vunpack.c.l.b16 %v854
        %v870 = vunpack.c.l.b16 %v855
        %v871 = vunpack.c.l.b16 %v856
        %v872 = vpack.c.b16 %v869, %v868
        %v873 = vpack.c.b16 %v871, %v870
        %v877 = vsel %vm349, %v852, 0
        %879 = vmatprep.subr.bf16.mxu0 0
        %880 = vmatpush1.bf16.msra.mxu0 %v872
        %881 = vmatprep.subr.bf16.mxu0 0
        %882 = vmatpush1.bf16.msra.mxu0 %v873
        %883 = vmatprep.subr.bf16.mxu0 0
        %884 = vmatpush1.bf16.msra.mxu0 0
        %885 = vmatprep.subr.bf16.mxu0 0
        %886 = vmatpush1.bf16.msra.mxu0 0
        %887 = vmatprep.subr.bf16.mxu0 0
        %888 = vmatpush1.bf16.msra.mxu0 0
        %889 = vmatprep.subr.bf16.mxu0 0
        %890 = vmatpush1.bf16.msra.mxu0 0
        %891 = vmatprep.subr.bf16.mxu0 0
        %892 = vmatpush1.bf16.msra.mxu0 0
        %893 = vmatprep.subr.bf16.mxu0 0
        %894 = vmatpush1.bf16.msra.mxu0 0
        %895 = vmatprep.subr.bf16.mxu0 0
        %896 = vmatpush1.bf16.msra.mxu0 0
        %897 = vmatprep.subr.bf16.mxu0 0
        %898 = vmatpush1.bf16.msra.mxu0 0
        %899 = vmatprep.subr.bf16.mxu0 0
        %900 = vmatpush1.bf16.msra.mxu0 0
        %901 = vmatprep.subr.bf16.mxu0 0
        %902 = vmatpush1.bf16.msra.mxu0 0
        %903 = vmatprep.subr.bf16.mxu0 0
        %904 = vmatpush1.bf16.msra.mxu0 0
        %905 = vmatprep.subr.bf16.mxu0 0
        %906 = vmatpush1.bf16.msra.mxu0 0
        %907 = vmatprep.subr.bf16.mxu0 0
        %908 = vmatpush1.bf16.msra.mxu0 0
        %909 = vmatprep.subr.bf16.mxu0 0
        %910 = vmatpush1.bf16.msra.mxu0 0
        %911 = vmatprep.mubr.bf16.mxu0 0
        %912 = vmatmul.mubr.bf16.gmra.mrb[0].mxu0 %v877
        %v913 = vpop.f32.mrb[0].mxu0
        %v914 = vadd.f32 %v862, %v913
        %v915 = vpop.f32.mrb[0].mxu0
        %v916 = vpop.f32.mrb[0].mxu0
        %v917 = vpop.f32.mrb[0].mxu0
        %918 = vdwg.mxu0
        %v919 = vadd.f32 %v324, %v914
        %v920 = vsel %vm349, %v919, 0.0
        %921 = vadd.xlane.f32.xlu0 %v920
        %v922 = vpop.xlane.xlu0 %921
        %v923 = vrcp.pop 32.0
        %v924 = vmul.f32 %v922, %v923
        %v925 = vsub.f32 %v919, %v924
        %v926 = vmul.f32 %v925, %v925
        %v927 = vsel %vm349, %v926, 0.0
        %928 = vadd.xlane.f32.xlu0 %v927
        %v929 = vpop.xlane.xlu0 %928
        %v930 = vmul.f32 %v929, %v923
        %v931 = vadd.f32 %v930, 1e-05
        %v932 = vrsqrt.pop %v931
        %v933 = vmul.f32 %v925, %v932
        %v934 = vld [vmem:[%s5] sm:$0x1]
        %v936 = vlaneseq
        %v937 = vshrl.u32 %v936, 7
        %v938 = vsub.s32 0, %v937
        %v939 = vrot.slane %v934, %v938
        %v941 = vmul.f32 %v933, %v939
        %v942 = vld [vmem:[%s6] sm:$0x1]
        %v944 = vlaneseq
        %v945 = vshrl.u32 %v944, 7
        %v946 = vsub.s32 0, %v945
        %v947 = vrot.slane %v942, %v946
        %v949 = vadd.f32 %v941, %v947
        %950 = vst.msk [vmem:[%s322] sm:$0xff] %vm349, %v949
        %s951 = sand.u32 %s185, 1
        %s952 = scalar_lea.sflag [#allocation4], %s951
        %s953 = sand.u32 %s185, 1
        %s954 = smul.addr %s953, 8
        %s955 = scalar_lea.vmem [#allocation8], %s954
        // Predicated region
        $region61: #{tpu_custom_call.1} parent=47 // pred_check
          %p956 = pneg %p195
        $region62: #{tpu_custom_call.1} parent=47 // pred_check_branch
          %958 = sbr.rel (%p956) target = $region64
        $region63: #{tpu_custom_call.1} parent=47 // pred_region
          %s960 = ssub.s32 128, 128
          %961 = vsyncadd %s952, %s960
          %s962 = smul.addr %s25, 128
          %s963 = scalar_lea.hbm %s7, %s962
          %s965 = sshll.u32 %s955, 4
          %s966 = int_to_ptr.vmem [resolvable:$true] %s965
          %968 = dma.vmem_to_hbm [thread:$0]  %s966, 128, %s963, %s952
        $region64: #{tpu_custom_call.1} parent=47 // pred_fallthru
          _
      $region48: #{tpu_custom_call.1} parent=5 // pred_fallthru
        _
      %p969 = scmp.le.s32.totalorder 2, %s20
      // Predicated region
      $region65: #{tpu_custom_call.1} parent=5 // pred_check
        %p970 = pneg %p969
      $region66: #{tpu_custom_call.1} parent=5 // pred_check_branch
        %972 = sbr.rel (%p970) target = $region68
      $region67: #{tpu_custom_call.1} parent=5 // pred_region
        %s973 = ssub.s32 %s20, 2
        // Predicated region
        $region69: #{tpu_custom_call.1} parent=67 // pred_check
          %p974 = pneg %p201
        $region70: #{tpu_custom_call.1} parent=67 // pred_check_branch
          %976 = sbr.rel (%p974) target = $region72
        $region71: #{tpu_custom_call.1} parent=67 // pred_region
          %s977 = sand.u32 %s186, 1
          %s978 = scalar_lea.sflag [#allocation4], %s977
          %s979 = sand.u32 %s186, 1
          %s980 = smul.addr %s979, 8
          %s981 = scalar_lea.vmem [#allocation8], %s980
          %982 = dma.done %s978, 128
        $region72: #{tpu_custom_call.1} parent=67 // pred_fallthru
          _
      $region68: #{tpu_custom_call.1} parent=5 // pred_fallthru
        _
    $region6: #{tpu_custom_call.1} parent=1 // loop_footer
      %s24 = sadd.s32 1, %s20
    $region7: #{tpu_custom_call.1} parent=1 // loop_footer_branch
      %19 = sbr.rel target = $region3
    $region8: #{tpu_custom_call.1} parent=1 // loop_exit
      _
    %983 = vsyncpa [#allocation3], 1
    %s984 = scalar_lea.sflag [#allocation3], 1
    %985 = vsyncpa %s984, 1
    %986 = vsyncpa [#allocation6], 1
    %987 = vsyncpa [#allocation4], 1
    %s988 = scalar_lea.sflag [#allocation4], 1
    %989 = vsyncpa %s988, 1

</llo_original>
